<compile_context>
chip_gen: v7x
topology: tpu7x:2x2x1
jax: 0.10.0
libtpu: 0.0.40
codegen_flags: <defaults>
</compile_context>

<pallas_src>
import math

import jax
import jax.numpy as jnp
from jax import lax
from jax.experimental import pallas as pl
from jax.experimental.pallas import tpu as pltpu


def _patch_merge_kernel(xe_ref, xo_ref, we_ref, wo_ref, colsum_ref, bias_ref, o_ref):
    # xe_ref / xo_ref: (th, Wh, 2C)   even / odd H-row chunks ([x0|x2] / [x1|x3])
    # we_ref / wo_ref: (2C, 2Cout)    gamma-folded weight row-blocks (matmul dtype)
    # colsum_ref:      (1, 2Cout)     column-sum of the folded (quantized) weights
    # bias_ref:        (1, 2Cout)     beta @ W
    # o_ref:           (th*Wh, 2Cout)
    th, wh, two_c = xe_ref.shape
    rows = th * wh

    # Merge leading dims -> 2-D rows for the MXU.
    # Layout-free when Wh is a multiple of the sublane tile (8 for f32).
    xe = xe_ref[...].reshape(rows, two_c)
    xo = xo_ref[...].reshape(rows, two_c)

    # Single-pass f32 LayerNorm statistics over the full 4C group (order-invariant).
    xe_f = xe.astype(jnp.float32)
    xo_f = xo.astype(jnp.float32)
    inv_4c = 1.0 / (2.0 * two_c)
    s1 = jnp.sum(xe_f, axis=-1, keepdims=True) + jnp.sum(xo_f, axis=-1, keepdims=True)
    s2 = jnp.sum(xe_f * xe_f, axis=-1, keepdims=True) + jnp.sum(xo_f * xo_f, axis=-1, keepdims=True)
    mean = s1 * inv_4c
    var = s2 * inv_4c - mean * mean
    inv_std = lax.rsqrt(var + 1e-5)

    # MXU runs on the RAW inputs (cast to the weight dtype); LN is folded afterwards.
    wdt = we_ref.dtype
    acc = jnp.dot(xe.astype(wdt), we_ref[...], preferred_element_type=jnp.float32)
    acc = acc + jnp.dot(xo.astype(wdt), wo_ref[...], preferred_element_type=jnp.float32)

    # Post-matmul LayerNorm fold: out = inv_std * (acc - mean*colsum) + bias.
    out = inv_std * (acc - mean * colsum_ref[...]) + bias_ref[...]
    o_ref[...] = out.astype(o_ref.dtype)


def patch_merging(x, w, gamma, beta, input_resolution, *,
                  matmul_dtype=jnp.bfloat16,
                  target_rows=4096,
                  vmem_budget_bytes=None,
                  vmem_limit_bytes=None):
    """x: [B, L, C] with L == H*W.  w: [4C, 2C] (= torch reduction.weight.T),
    gamma/beta: [4C].  Returns [B, (H/2)*(W/2), 2C], matching PatchMerging.forward.
    """
    H, W = input_resolution
    B, L, C = x.shape
    assert L == H * W, "input feature has wrong size"
    assert H % 2 == 0 and W % 2 == 0, f"x size ({H}*{W}) are not even."
    Hh, Wh = H // 2, W // 2
    BHh = B * Hh
    M = BHh * Wh
    Cout = 2 * C

    # ---- per-generation VMEM limits: headroom below physical VMEM -------------
    if vmem_limit_bytes is None:
        try:
            cap = int(pltpu.get_tpu_info().vmem_capacity_bytes)
        except Exception:
            cap = 64 * 1024 * 1024      # conservative (v7x per-TensorCore VMEM)
        vmem_limit_bytes = min(int(cap * 0.8), 100 * 1024 * 1024)
    if vmem_budget_bytes is None:
        vmem_budget_bytes = (int(vmem_limit_bytes) * 3) // 4

    # Free reshape: [B, H*W, C] -> [B*Hh, 2, Wh, 2C].
    #   [p, 0, r, :] = [x0 | x2] channels of merged patch p*Wh + r
    #   [p, 1, r, :] = [x1 | x3] channels
    xr = x.reshape(BHh, 2, Wh, 2 * C)

    # ---- fold LayerNorm affine into the projection (trace time, tiny arrays) ----
    gamma_f = gamma.astype(jnp.float32).reshape(4 * C)
    beta_f = beta.astype(jnp.float32).reshape(4 * C)
    w_f = w.astype(jnp.float32)                            # [4C, 2Cout] (torch order)
    w_fold = gamma_f[:, None] * w_f                        # gamma folded into rows
    bias = (beta_f[None, :] @ w_f).astype(jnp.float32)     # [1, 2Cout]
    # Permute weight rows to the kernel's chunk order: even=[x0|x2], odd=[x1|x3],
    # and cast to the MXU dtype (bf16 by default -> single-pass MXU, small resident buffers).
    w_e = jnp.concatenate([w_fold[0:C], w_fold[2 * C:3 * C]], axis=0).astype(matmul_dtype)
    w_o = jnp.concatenate([w_fold[C:2 * C], w_fold[3 * C:4 * C]], axis=0).astype(matmul_dtype)
    # Column-sum of the *quantized* folded weights (so the -mean fold matches the MXU exactly).
    colsum = (jnp.sum(w_e.astype(jnp.float32), axis=0, keepdims=True)
              + jnp.sum(w_o.astype(jnp.float32), axis=0, keepdims=True))   # [1, 2Cout] f32

    # ---- tile selection: big row tiles, honest VMEM model, even grid steps -----
    x_bpe = jnp.dtype(x.dtype).itemsize
    w_bpe = jnp.dtype(matmul_dtype).itemsize
    # Per merged output row: pipelined buffers + in-kernel temporaries.
    per_row = 2 * (4 * C) * x_bpe          # double-buffered (4C) input rows
    per_row += 2 * Cout * x_bpe            # double-buffered (2C) output rows
    per_row += (4 * C) * w_bpe             # matmul-dtype casts of xe/xo feeding the MXU
    per_row += (4 * C) * 4                 # f32 squared temporaries for LN stats
    per_row += 2 * Cout * 4                # f32 acc + folded output
    weight_bytes = 2 * (2 * C) * Cout * w_bpe * 2     # w_e / w_o (double-buffered)
    weight_bytes += 2 * 2 * Cout * 4                  # colsum + bias
    # NOTE: w_e/w_o/colsum/bias have constant index_maps; pl.Buffered(1) would
    # reclaim half their VMEM (only matters at large C on v7x), skipped here.
    rows_cap = max(Wh, (vmem_budget_bytes - weight_bytes) // per_row)
    rows_target = max(Wh, min(target_rows, rows_cap))
    th = max(1, min(BHh, rows_target // Wh))

    # Output block second-to-last dim (th*Wh) must be a multiple of the sublane
    # tile (or the full extent).  NOTE: the in-kernel (th,Wh,2C)->(th*Wh,2C)
    # reshape is only layout-free when Wh itself is a multiple of `sub`; for
    # non-aligned Swin stages (Wh=28/14/7) it costs a per-step retile copy —
    # pad Wh in the BlockSpec + mask tail rows on store to avoid it.
    sub = max(8, 32 // x_bpe)                    # 8 for f32, 16 for bf16
    q = sub // math.gcd(Wh, sub)
    if BHh >= q:
        th = max(q, (th // q) * q)
    else:
        th = BHh                                  # full extent -> block equals array dim

    # Megacore / two-TensorCore load balance: force an even number of grid steps (>= 2).
    n_steps = -(-BHh // th)
    if BHh > q and (n_steps < 2 or n_steps % 2 == 1):
        n_target = max(2, n_steps + (n_steps % 2))
        th_new = -(-BHh // n_target)              # balanced block size
        th_new = -(-th_new // q) * q              # round up to alignment multiple
        if q <= th_new < BHh and (-(-BHh // th_new)) % 2 == 0:
            th = th_new

    grid = (pl.cdiv(BHh, th),)
    rows_blk = th * Wh

    out2d = pl.pallas_call(
        _patch_merge_kernel,
        out_shape=jax.ShapeDtypeStruct((M, Cout), x.dtype),
        grid_spec=pltpu.PrefetchScalarGridSpec(
            num_scalar_prefetch=0,
            grid=grid,
            in_specs=[
                # even H rows -> [x0|x2] chunks (contiguous W*C HBM segments)
                pl.BlockSpec((th, None, Wh, 2 * C), lambda i: (i, 0, 0, 0)),
                # odd H rows  -> [x1|x3] chunks
                pl.BlockSpec((th, None, Wh, 2 * C), lambda i: (i, 1, 0, 0)),
                pl.BlockSpec((2 * C, Cout), lambda i: (0, 0)),   # w_e (resident)
                pl.BlockSpec((2 * C, Cout), lambda i: (0, 0)),   # w_o (resident)
                pl.BlockSpec((1, Cout), lambda i: (0, 0)),       # colsum(Wg)
                pl.BlockSpec((1, Cout), lambda i: (0, 0)),       # beta @ W
            ],
            out_specs=pl.BlockSpec((rows_blk, Cout), lambda i: (i, 0)),
        ),
        compiler_params=pltpu.CompilerParams(
            dimension_semantics=("parallel",),
            vmem_limit_bytes=int(vmem_limit_bytes),
        ),
    )(xr, xr, w_e, w_o, colsum, bias)

    return out2d.reshape(B, Hh * Wh, Cout)


def _reference(x, w, gamma, beta, input_resolution):
    """Plain-JAX equivalent of the torch module (f32 math)."""
    H, W = input_resolution
    B, L, C = x.shape
    xr = x.reshape(B, H, W, C).astype(jnp.float32)
    x0 = xr[:, 0::2, 0::2, :]
    x1 = xr[:, 1::2, 0::2, :]
    x2 = xr[:, 0::2, 1::2, :]
    x3 = xr[:, 1::2, 1::2, :]
    xc = jnp.concatenate([x0, x1, x2, x3], axis=-1).reshape(B, -1, 4 * C)
    mean = jnp.mean(xc, axis=-1, keepdims=True)
    var = jnp.mean((xc - mean) ** 2, axis=-1, keepdims=True)
    xn = (xc - mean) * lax.rsqrt(var + 1e-5) * gamma.astype(jnp.float32) + beta.astype(jnp.float32)
    return jnp.einsum("blk,kd->bld", xn, w.astype(jnp.float32))


if __name__ == "__main__":
    # Small, lane-dense shapes: B=2, H=W=16, C=64 -> 4C=256, 2C=128, Wh=8 (sublane-aligned).
    B, H, W, C = 2, 16, 16, 64
    key = jax.random.PRNGKey(0)
    kx, kw, kg, kb = jax.random.split(key, 4)

    x = jax.random.normal(kx, (B, H * W, C), dtype=jnp.float32)
    # torch stores reduction.weight as [2C, 4C]; we hold its transpose [4C, 2C].
    w = jax.random.normal(kw, (4 * C, 2 * C), dtype=jnp.float32) * 0.02
    gamma = 1.0 + 0.1 * jax.random.normal(kg, (4 * C,), dtype=jnp.float32)
    beta = 0.1 * jax.random.normal(kb, (4 * C,), dtype=jnp.float32)

    ref = _reference(x, w, gamma, beta, (H, W))

    # f32-MXU path: validates the post-matmul LayerNorm fold bit-for-bit-ish.
    out_f32 = patch_merging(x, w, gamma, beta, (H, W), matmul_dtype=jnp.float32)
    out_f32 = jax.block_until_ready(out_f32)
    assert out_f32.shape == (B, (H // 2) * (W // 2), 2 * C)
    err_f32 = float(jnp.max(jnp.abs(out_f32.astype(jnp.float32) - ref)))
    assert err_f32 < 5e-4, f"f32 path max abs err {err_f32}"

    # Default (bf16-weight) path: the fast, bandwidth-friendly configuration.
    out_bf16 = patch_merging(x, w, gamma, beta, (H, W))
    out_bf16 = jax.block_until_ready(out_bf16)
    assert out_bf16.shape == (B, (H // 2) * (W // 2), 2 * C)
    err_bf16 = float(jnp.max(jnp.abs(out_bf16.astype(jnp.float32) - ref)))
    assert err_bf16 < 2e-2, f"bf16 path max abs err {err_bf16}"

    print("KERNEL_OK")
</pallas_src>

<mosaic_0001>
module attributes {stable_mosaic.version = 11 : i64} {
  func.func @_patch_merge_kernel(%arg0: i32, %arg1: memref<8x1x8x128xf32, #tpu.memory_space<vmem>>, %arg2: memref<8x1x8x128xf32, #tpu.memory_space<vmem>>, %arg3: memref<128x128xf32, #tpu.memory_space<vmem>>, %arg4: memref<128x128xf32, #tpu.memory_space<vmem>>, %arg5: memref<1x128xf32, #tpu.memory_space<vmem>>, %arg6: memref<1x128xf32, #tpu.memory_space<vmem>>, %arg7: memref<64x128xf32, #tpu.memory_space<vmem>>) attributes {dimension_semantics = [#tpu.dimension_semantics<parallel>], iteration_bounds = array<i64: 2>, scalar_prefetch = 0 : i64, scratch_operands = 0 : i64, tpu.core_type = #tpu.core_type<tc>, window_params = [{transform_indices = @transform_0, window_bounds = array<i64: 8, 1, 8, 128>}, {transform_indices = @transform_1, window_bounds = array<i64: 8, 1, 8, 128>}, {pipeline_mode = #tpu.pipeline_mode<synchronous>, transform_indices = @transform_2, window_bounds = array<i64: 128, 128>}, {pipeline_mode = #tpu.pipeline_mode<synchronous>, transform_indices = @transform_3, window_bounds = array<i64: 128, 128>}, {pipeline_mode = #tpu.pipeline_mode<synchronous>, transform_indices = @transform_4, window_bounds = array<i64: 1, 128>}, {pipeline_mode = #tpu.pipeline_mode<synchronous>, transform_indices = @transform_5, window_bounds = array<i64: 1, 128>}, {transform_indices = @transform_6, window_bounds = array<i64: 64, 128>}]} {
    %c0 = arith.constant 0 : index
    %c0_0 = arith.constant 0 : index
    %c0_1 = arith.constant 0 : index
    %c0_2 = arith.constant 0 : index
    %0 = vector.load %arg1[%c0, %c0_0, %c0_1, %c0_2] : memref<8x1x8x128xf32, #tpu.memory_space<vmem>>, vector<8x1x8x128xf32>
    %1 = vector.shape_cast %0 : vector<8x1x8x128xf32> to vector<8x8x128xf32>
    %2 = vector.shape_cast %1 : vector<8x8x128xf32> to vector<64x128xf32>
    %c0_3 = arith.constant 0 : index
    %c0_4 = arith.constant 0 : index
    %c0_5 = arith.constant 0 : index
    %c0_6 = arith.constant 0 : index
    %3 = vector.load %arg2[%c0_3, %c0_4, %c0_5, %c0_6] : memref<8x1x8x128xf32, #tpu.memory_space<vmem>>, vector<8x1x8x128xf32>
    %4 = vector.shape_cast %3 : vector<8x1x8x128xf32> to vector<8x8x128xf32>
    %5 = vector.shape_cast %4 : vector<8x8x128xf32> to vector<64x128xf32>
    %cst = arith.constant dense<0.000000e+00> : vector<64xf32>
    %6 = vector.multi_reduction <add>, %2, %cst [1] : vector<64x128xf32> to vector<64xf32>
    %7 = vector.shape_cast %6 : vector<64xf32> to vector<64x1xf32>
    %cst_7 = arith.constant dense<0.000000e+00> : vector<64xf32>
    %8 = vector.multi_reduction <add>, %5, %cst_7 [1] : vector<64x128xf32> to vector<64xf32>
    %9 = vector.shape_cast %8 : vector<64xf32> to vector<64x1xf32>
    %10 = arith.addf %7, %9 : vector<64x1xf32>
    %11 = arith.mulf %2, %2 : vector<64x128xf32>
    %cst_8 = arith.constant dense<0.000000e+00> : vector<64xf32>
    %12 = vector.multi_reduction <add>, %11, %cst_8 [1] : vector<64x128xf32> to vector<64xf32>
    %13 = vector.shape_cast %12 : vector<64xf32> to vector<64x1xf32>
    %14 = arith.mulf %5, %5 : vector<64x128xf32>
    %cst_9 = arith.constant dense<0.000000e+00> : vector<64xf32>
    %15 = vector.multi_reduction <add>, %14, %cst_9 [1] : vector<64x128xf32> to vector<64xf32>
    %16 = vector.shape_cast %15 : vector<64xf32> to vector<64x1xf32>
    %17 = arith.addf %13, %16 : vector<64x1xf32>
    %cst_10 = arith.constant 3.906250e-03 : f32
    %18 = vector.broadcast %cst_10 : f32 to vector<64x1xf32>
    %19 = arith.mulf %10, %18 : vector<64x1xf32>
    %cst_11 = arith.constant 3.906250e-03 : f32
    %20 = vector.broadcast %cst_11 : f32 to vector<64x1xf32>
    %21 = arith.mulf %17, %20 : vector<64x1xf32>
    %22 = arith.mulf %19, %19 : vector<64x1xf32>
    %23 = arith.subf %21, %22 : vector<64x1xf32>
    %cst_12 = arith.constant 9.99999974E-6 : f32
    %24 = vector.broadcast %cst_12 : f32 to vector<64x1xf32>
    %25 = arith.addf %23, %24 : vector<64x1xf32>
    %26 = math.rsqrt %25 : vector<64x1xf32>
    %c0_13 = arith.constant 0 : index
    %c0_14 = arith.constant 0 : index
    %27 = vector.load %arg3[%c0_13, %c0_14] : memref<128x128xf32, #tpu.memory_space<vmem>>, vector<128x128xf32>
    %cst_15 = arith.constant dense<0.000000e+00> : vector<64x128xf32>
    %28 = tpu.matmul %2, %27, %cst_15 {dimension_numbers = #tpu.dot_dimension_numbers<[1], [0], [0], [1], [0, 0, 1, 1], [], []>} : vector<64x128xf32>, vector<128x128xf32>, vector<64x128xf32> -> vector<64x128xf32>
    %c0_16 = arith.constant 0 : index
    %c0_17 = arith.constant 0 : index
    %29 = vector.load %arg4[%c0_16, %c0_17] : memref<128x128xf32, #tpu.memory_space<vmem>>, vector<128x128xf32>
    %cst_18 = arith.constant dense<0.000000e+00> : vector<64x128xf32>
    %30 = tpu.matmul %5, %29, %cst_18 {dimension_numbers = #tpu.dot_dimension_numbers<[1], [0], [0], [1], [0, 0, 1, 1], [], []>} : vector<64x128xf32>, vector<128x128xf32>, vector<64x128xf32> -> vector<64x128xf32>
    %31 = arith.addf %28, %30 : vector<64x128xf32>
    %c0_19 = arith.constant 0 : index
    %c0_20 = arith.constant 0 : index
    %32 = vector.load %arg5[%c0_19, %c0_20] : memref<1x128xf32, #tpu.memory_space<vmem>>, vector<1x128xf32>
    %33 = vector.broadcast %19 : vector<64x1xf32> to vector<64x128xf32>
    %34 = vector.broadcast %32 : vector<1x128xf32> to vector<64x128xf32>
    %35 = arith.mulf %33, %34 : vector<64x128xf32>
    %36 = arith.subf %31, %35 : vector<64x128xf32>
    %37 = vector.broadcast %26 : vector<64x1xf32> to vector<64x128xf32>
    %38 = arith.mulf %37, %36 : vector<64x128xf32>
    %c0_21 = arith.constant 0 : index
    %c0_22 = arith.constant 0 : index
    %39 = vector.load %arg6[%c0_21, %c0_22] : memref<1x128xf32, #tpu.memory_space<vmem>>, vector<1x128xf32>
    %40 = vector.broadcast %39 : vector<1x128xf32> to vector<64x128xf32>
    %41 = arith.addf %38, %40 : vector<64x128xf32>
    %c0_23 = arith.constant 0 : index
    %c0_24 = arith.constant 0 : index
    %42 = vector.load %arg7[%c0_23, %c0_24] : memref<64x128xf32, #tpu.memory_space<vmem>>, vector<64x128xf32>
    tpu.vector_store %arg7[%c0_23, %c0_24], %41 {strides = array<i32>} : memref<64x128xf32, #tpu.memory_space<vmem>>, vector<64x128xf32>,
    return
  }
  func.func @transform_0(%arg0: i32) -> (i32, i32, i32, i32) {
    %c0_i32 = arith.constant 0 : i32
    %c0_i32_0 = arith.constant 0 : i32
    %c0_i32_1 = arith.constant 0 : i32
    %c0_i32_2 = arith.constant 0 : i32
    return %arg0, %c0_i32, %c0_i32_0, %c0_i32_1 : i32, i32, i32, i32
  }
  func.func @transform_1(%arg0: i32) -> (i32, i32, i32, i32) {
    %c1_i32 = arith.constant 1 : i32
    %c0_i32 = arith.constant 0 : i32
    %c0_i32_0 = arith.constant 0 : i32
    %c0_i32_1 = arith.constant 0 : i32
    return %arg0, %c1_i32, %c0_i32, %c0_i32_0 : i32, i32, i32, i32
  }
  func.func @transform_2(%arg0: i32) -> (i32, i32) {
    %c0_i32 = arith.constant 0 : i32
    %c0_i32_0 = arith.constant 0 : i32
    %c0_i32_1 = arith.constant 0 : i32
    return %c0_i32, %c0_i32_0 : i32, i32
  }
  func.func @transform_3(%arg0: i32) -> (i32, i32) {
    %c0_i32 = arith.constant 0 : i32
    %c0_i32_0 = arith.constant 0 : i32
    %c0_i32_1 = arith.constant 0 : i32
    return %c0_i32, %c0_i32_0 : i32, i32
  }
  func.func @transform_4(%arg0: i32) -> (i32, i32) {
    %c0_i32 = arith.constant 0 : i32
    %c0_i32_0 = arith.constant 0 : i32
    %c0_i32_1 = arith.constant 0 : i32
    return %c0_i32, %c0_i32_0 : i32, i32
  }
  func.func @transform_5(%arg0: i32) -> (i32, i32) {
    %c0_i32 = arith.constant 0 : i32
    %c0_i32_0 = arith.constant 0 : i32
    %c0_i32_1 = arith.constant 0 : i32
    return %c0_i32, %c0_i32_0 : i32, i32
  }
  func.func @transform_6(%arg0: i32) -> (i32, i32) {
    %c0_i32 = arith.constant 0 : i32
    %c0_i32_0 = arith.constant 0 : i32
    return %arg0, %c0_i32 : i32, i32
  }
}

</mosaic_0001>

<llo_original>
// kernel: tpu_custom_call.1
$region0: #{tpu_custom_call.1}
  #allocation0 [shape = 'u32[]', space=smem, size = 0x4, offset = 0x4, fixed_abs, tag = 'smem constant byte address 0x4 - core index']
  #allocation1 [shape = 'u32[144,128]{1,0:T(1,128)}', space=vmem, size = 0x12000, scoped, tag = 'internal scratch']
  %s0 = inlined_call_operand.hbm [shape: f32[16,2,8,128], index: 0, kind: input, shape index: {}]
  %s1 = inlined_call_operand.hbm [shape: f32[16,2,8,128], index: 1, kind: input, shape index: {}]
  %s2 = inlined_call_operand.hbm [shape: f32[128,128], index: 2, kind: input, shape index: {}]
  %s3 = inlined_call_operand.hbm [shape: f32[128,128], index: 3, kind: input, shape index: {}]
  %s4 = inlined_call_operand.vmem [shape: f32[1,128], index: 4, kind: input, shape index: {}]
  %s5 = inlined_call_operand.vmem [shape: f32[1,128], index: 5, kind: input, shape index: {}]
  %s6 = inlined_call_operand.hbm [shape: f32[128,128], index: 6, kind: output, shape index: {}]
  %s7 = sld [smem:[#allocation0]]
  $region73: #{tpu_custom_call.1} parent=0
    _
  %s9 = ssub.s32 1, %s7
  %s10 = scalar_select 0, %s9, %s7
  $region1: #{tpu_custom_call.1} parent=0
    #allocation2 [shape = 'u8[65536]{0}', space=vmem, size = 0x10000, scoped, tag = 'input window, operand 0']
    #allocation3 [shape = 's32[2]{0}', space=sflag, size = 0x8, scoped, tag = 'scoped memory for tpu_custom_call.1']
    #allocation4 [shape = 's32[2]{0}', space=sflag, size = 0x8, scoped, tag = 'scoped memory for tpu_custom_call.1']
    #allocation5 [shape = 'u8[65536]{0}', space=vmem, size = 0x10000, scoped, tag = 'input window, operand 1']
    #allocation6 [shape = 's32[2]{0}', space=sflag, size = 0x8, scoped, tag = 'scoped memory for tpu_custom_call.1']
    #allocation7 [shape = 'u8[65536]{0}', space=vmem, size = 0x10000, scoped, tag = 'input window, operand 2, single buffered']
    #allocation8 [shape = 'u8[65536]{0}', space=vmem, size = 0x10000, scoped, tag = 'input window, operand 3, single buffered']
    #allocation9 [shape = 's32[1]{0}', space=sflag, size = 0x4, scoped, tag = 'scoped memory for tpu_custom_call.1']
    #allocation10 [shape = 'u8[65536]{0}', space=vmem, size = 0x10000, scoped, tag = 'output window, operand 0']
    %11 = vsyncpa [#allocation3], 0
    %s12 = scalar_lea.sflag [#allocation3], 1
    %13 = vsyncpa %s12, 0
    %14 = vsyncpa [#allocation6], 0
    %s15 = scalar_lea.sflag [#allocation6], 1
    %16 = vsyncpa %s15, 0
    %17 = vsyncpa [#allocation9], 0
    %18 = vsyncpa [#allocation4], 0
    %s19 = scalar_lea.sflag [#allocation4], 1
    %20 = vsyncpa %s19, 0
    loop: start=0, step=1, limit=4
    $region2: #{tpu_custom_call.1} parent=1 // loop_pre_header
      _
    $region3: #{tpu_custom_call.1} parent=1 // loop_header
      %s22 = sphi 0, %s26
      %p23 = scmp.ge.s32.totalorder %s22, 4
      %s32 = sphi 0, %s34
      %s35 = sphi 0, %s32
      %s36 = sphi 0, %s35
      %s52 = sphi 0, %s36
      %s58 = sphi 0, %s60
      %s61 = sphi 0, %s58
      %s62 = sphi 0, %s61
      %s78 = sphi 0, %s62
      %s82 = sphi 0, %s82
      %s84 = sphi 0, %s82
      %s85 = sphi 0, %s84
      %s99 = sphi 0, %s85
      %s103 = sphi 0, %s103
      %s105 = sphi 0, %s103
      %s106 = sphi 0, %s105
      %s120 = sphi 0, %s106
      %s124 = sphi 0, %s124
      %s126 = sphi 0, %s124
      %s127 = sphi 0, %s126
      %s141 = sphi 0, %s127
      %s145 = sphi 0, %s145
      %s147 = sphi 0, %s145
      %s148 = sphi 0, %s147
      %s162 = sphi 0, %s148
      %s168 = sphi 0, %s170
      %s171 = sphi 0, %s168
      %s172 = sphi 0, %s171
      %s188 = sphi 0, %s172
    $region4: #{tpu_custom_call.1} parent=1 // loop_header_branch
      %25 = sbr.rel (%p23) target = $region8
    $region5: #{tpu_custom_call.1} parent=1 // loop_body
      %s27 = ssub.s32 %s22, 1
      %s28 = ssub.s32 %s22, 2
      %s29 = sadd.s32 %s22, 1
      %s30 = ssub.s32 %s22, %s29
      %p31 = scmp.eq.s32.totalorder %s30, 0
      %s33 = sadd.s32 %s32, 1
      %s34 = scalar_select %p31, %s32, %s33
      %p37 = pneg %p31
      %p38 = scmp.eq.s32.totalorder %s22, 1
      %p39 = por %p37, %p38
      %p40 = scmp.ne.s32.totalorder %s32, %s35
      %p41 = scmp.eq.s32.totalorder %s22, 0
      %p42 = por %p40, %p41
      %p43 = scmp.ne.s32.totalorder %s32, %s35
      %p44 = scmp.eq.s32.totalorder %s27, 1
      %p45 = por %p43, %p44
      %p46 = scmp.ne.s32.totalorder %s35, %s36
      %p47 = scmp.eq.s32.totalorder %s27, 0
      %p48 = por %p46, %p47
      %p49 = scmp.ne.s32.totalorder %s35, %s36
      %p50 = scmp.eq.s32.totalorder %s28, 1
      %p51 = por %p49, %p50
      %p53 = scmp.ne.s32.totalorder %s36, %s52
      %p54 = scmp.eq.s32.totalorder %s28, 0
      %p55 = por %p53, %p54
      %s56 = ssub.s32 %s22, %s29
      %p57 = scmp.eq.s32.totalorder %s56, 0
      %s59 = sadd.s32 %s58, 1
      %s60 = scalar_select %p57, %s58, %s59
      %p63 = pneg %p57
      %p64 = scmp.eq.s32.totalorder %s22, 1
      %p65 = por %p63, %p64
      %p66 = scmp.ne.s32.totalorder %s58, %s61
      %p67 = scmp.eq.s32.totalorder %s22, 0
      %p68 = por %p66, %p67
      %p69 = scmp.ne.s32.totalorder %s58, %s61
      %p70 = scmp.eq.s32.totalorder %s27, 1
      %p71 = por %p69, %p70
      %p72 = scmp.ne.s32.totalorder %s61, %s62
      %p73 = scmp.eq.s32.totalorder %s27, 0
      %p74 = por %p72, %p73
      %p75 = scmp.ne.s32.totalorder %s61, %s62
      %p76 = scmp.eq.s32.totalorder %s28, 1
      %p77 = por %p75, %p76
      %p79 = scmp.ne.s32.totalorder %s62, %s78
      %p80 = scmp.eq.s32.totalorder %s28, 0
      %p81 = por %p79, %p80
      %s83 = sadd.s32 %s82, 1
      %p86 = scmp.eq.s32.totalorder %s22, 1
      %p87 = scmp.ne.s32.totalorder %s82, %s84
      %p88 = scmp.eq.s32.totalorder %s22, 0
      %p89 = por %p87, %p88
      %p90 = scmp.ne.s32.totalorder %s82, %s84
      %p91 = scmp.eq.s32.totalorder %s27, 1
      %p92 = por %p90, %p91
      %p93 = scmp.ne.s32.totalorder %s84, %s85
      %p94 = scmp.eq.s32.totalorder %s27, 0
      %p95 = por %p93, %p94
      %p96 = scmp.ne.s32.totalorder %s84, %s85
      %p97 = scmp.eq.s32.totalorder %s28, 1
      %p98 = por %p96, %p97
      %p100 = scmp.ne.s32.totalorder %s85, %s99
      %p101 = scmp.eq.s32.totalorder %s28, 0
      %p102 = por %p100, %p101
      %s104 = sadd.s32 %s103, 1
      %p107 = scmp.eq.s32.totalorder %s22, 1
      %p108 = scmp.ne.s32.totalorder %s103, %s105
      %p109 = scmp.eq.s32.totalorder %s22, 0
      %p110 = por %p108, %p109
      %p111 = scmp.ne.s32.totalorder %s103, %s105
      %p112 = scmp.eq.s32.totalorder %s27, 1
      %p113 = por %p111, %p112
      %p114 = scmp.ne.s32.totalorder %s105, %s106
      %p115 = scmp.eq.s32.totalorder %s27, 0
      %p116 = por %p114, %p115
      %p117 = scmp.ne.s32.totalorder %s105, %s106
      %p118 = scmp.eq.s32.totalorder %s28, 1
      %p119 = por %p117, %p118
      %p121 = scmp.ne.s32.totalorder %s106, %s120
      %p122 = scmp.eq.s32.totalorder %s28, 0
      %p123 = por %p121, %p122
      %s125 = sadd.s32 %s124, 1
      %p128 = scmp.eq.s32.totalorder %s22, 1
      %p129 = scmp.ne.s32.totalorder %s124, %s126
      %p130 = scmp.eq.s32.totalorder %s22, 0
      %p131 = por %p129, %p130
      %p132 = scmp.ne.s32.totalorder %s124, %s126
      %p133 = scmp.eq.s32.totalorder %s27, 1
      %p134 = por %p132, %p133
      %p135 = scmp.ne.s32.totalorder %s126, %s127
      %p136 = scmp.eq.s32.totalorder %s27, 0
      %p137 = por %p135, %p136
      %p138 = scmp.ne.s32.totalorder %s126, %s127
      %p139 = scmp.eq.s32.totalorder %s28, 1
      %p140 = por %p138, %p139
      %p142 = scmp.ne.s32.totalorder %s127, %s141
      %p143 = scmp.eq.s32.totalorder %s28, 0
      %p144 = por %p142, %p143
      %s146 = sadd.s32 %s145, 1
      %p149 = scmp.eq.s32.totalorder %s22, 1
      %p150 = scmp.ne.s32.totalorder %s145, %s147
      %p151 = scmp.eq.s32.totalorder %s22, 0
      %p152 = por %p150, %p151
      %p153 = scmp.ne.s32.totalorder %s145, %s147
      %p154 = scmp.eq.s32.totalorder %s27, 1
      %p155 = por %p153, %p154
      %p156 = scmp.ne.s32.totalorder %s147, %s148
      %p157 = scmp.eq.s32.totalorder %s27, 0
      %p158 = por %p156, %p157
      %p159 = scmp.ne.s32.totalorder %s147, %s148
      %p160 = scmp.eq.s32.totalorder %s28, 1
      %p161 = por %p159, %p160
      %p163 = scmp.ne.s32.totalorder %s148, %s162
      %p164 = scmp.eq.s32.totalorder %s28, 0
      %p165 = por %p163, %p164
      %s166 = ssub.s32 %s22, %s29
      %p167 = scmp.eq.s32.totalorder %s166, 0
      %s169 = sadd.s32 %s168, 1
      %s170 = scalar_select %p167, %s168, %s169
      %p173 = pneg %p167
      %p174 = scmp.eq.s32.totalorder %s22, 1
      %p175 = por %p173, %p174
      %p176 = scmp.ne.s32.totalorder %s168, %s171
      %p177 = scmp.eq.s32.totalorder %s22, 0
      %p178 = por %p176, %p177
      %p179 = scmp.ne.s32.totalorder %s168, %s171
      %p180 = scmp.eq.s32.totalorder %s27, 1
      %p181 = por %p179, %p180
      %p182 = scmp.ne.s32.totalorder %s171, %s172
      %p183 = scmp.eq.s32.totalorder %s27, 0
      %p184 = por %p182, %p183
      %p185 = scmp.ne.s32.totalorder %s171, %s172
      %p186 = scmp.eq.s32.totalorder %s28, 1
      %p187 = por %p185, %p186
      %p189 = scmp.ne.s32.totalorder %s172, %s188
      %p190 = scmp.eq.s32.totalorder %s28, 0
      %p191 = por %p189, %p190
      %p192 = scmp.le.s32.totalorder 1, %s22
      %p193 = scmp.lt.s32.totalorder %s22, 3
      %p194 = pnand %p192, %p193
      %p195 = pneg %p194
      // Predicated region
      $region9: #{tpu_custom_call.1} parent=5 // pred_check
        _
      $region10: #{tpu_custom_call.1} parent=5 // pred_check_branch
        %197 = sbr.rel (%p194) target = $region12
      $region11: #{tpu_custom_call.1} parent=5 // pred_region
        %s198 = ssub.s32 %s22, 1
        // Predicated region
        $region13: #{tpu_custom_call.1} parent=11 // pred_check
          %p199 = pneg %p95
        $region14: #{tpu_custom_call.1} parent=11 // pred_check_branch
          %201 = sbr.rel (%p199) target = $region16
        $region15: #{tpu_custom_call.1} parent=11 // pred_region
          %s203 = ssub.s32 2048, 2048
          %204 = vsyncadd [#allocation6], %s203
          %s205 = sshll.u32 [#allocation7], 4
          %s206 = int_to_ptr.vmem [resolvable:$true] %s205
          %211 = dma.hbm_to_vmem [thread:$0]  %s2, 2048, %s206, [#allocation6], 128, 128, 8
        $region16: #{tpu_custom_call.1} parent=11 // pred_fallthru
          _
        // Predicated region
        $region17: #{tpu_custom_call.1} parent=11 // pred_check
          %p212 = pneg %p116
        $region18: #{tpu_custom_call.1} parent=11 // pred_check_branch
          %214 = sbr.rel (%p212) target = $region20
        $region19: #{tpu_custom_call.1} parent=11 // pred_region
          %s216 = ssub.s32 2048, 2048
          %217 = vsyncadd [#allocation9], %s216
          %s218 = sshll.u32 [#allocation8], 4
          %s219 = int_to_ptr.vmem [resolvable:$true] %s218
          %224 = dma.hbm_to_vmem [thread:$0]  %s3, 2048, %s219, [#allocation9], 128, 128, 8
        $region20: #{tpu_custom_call.1} parent=11 // pred_fallthru
          _
        // Predicated region
        $region21: #{tpu_custom_call.1} parent=11 // pred_check
          %p225 = pneg %p137
        $region22: #{tpu_custom_call.1} parent=11 // pred_check_branch
          %227 = sbr.rel (%p225) target = $region24
        $region23: #{tpu_custom_call.1} parent=11 // pred_region
          _
        $region24: #{tpu_custom_call.1} parent=11 // pred_fallthru
          _
        // Predicated region
        $region25: #{tpu_custom_call.1} parent=11 // pred_check
          %p228 = pneg %p158
        $region26: #{tpu_custom_call.1} parent=11 // pred_check_branch
          %230 = sbr.rel (%p228) target = $region28
        $region27: #{tpu_custom_call.1} parent=11 // pred_region
          _
        $region28: #{tpu_custom_call.1} parent=11 // pred_fallthru
          _
      $region12: #{tpu_custom_call.1} parent=5 // pred_fallthru
        _
      %p231 = scmp.lt.s32.totalorder %s22, 2
      // Predicated region
      $region29: #{tpu_custom_call.1} parent=5 // pred_check
        %p232 = pneg %p231
      $region30: #{tpu_custom_call.1} parent=5 // pred_check_branch
        %234 = sbr.rel (%p232) target = $region32
      $region31: #{tpu_custom_call.1} parent=5 // pred_region
        // Predicated region
        $region33: #{tpu_custom_call.1} parent=31 // pred_check
          %p235 = pneg %p42
        $region34: #{tpu_custom_call.1} parent=31 // pred_check_branch
          %237 = sbr.rel (%p235) target = $region36
        $region35: #{tpu_custom_call.1} parent=31 // pred_region
          %s238 = sand.u32 %s32, 1
          %s239 = scalar_lea.sflag [#allocation3], %s238
          %s240 = sand.u32 %s32, 1
          %s241 = smul.addr %s240, 64
          %s242 = scalar_lea.vmem [#allocation2], %s241
          %s243 = smul.u32 8, %s22
          %s245 = ssub.s32 1024, 1024
          %246 = vsyncadd %s239, %s245
          %s247 = smul.addr %s243, 2
          %s248 = smul.addr %s247, 128
          %s249 = scalar_lea.hbm %s0, %s248
          %s250 = sshll.u32 %s242, 4
          %s251 = int_to_ptr.vmem [resolvable:$true] %s250
          %256 = dma.hbm_to_vmem [thread:$0]  %s249, 1024, %s251, %s239, 256, 128, 8
        $region36: #{tpu_custom_call.1} parent=31 // pred_fallthru
          _
        // Predicated region
        $region37: #{tpu_custom_call.1} parent=31 // pred_check
          %p257 = pneg %p68
        $region38: #{tpu_custom_call.1} parent=31 // pred_check_branch
          %259 = sbr.rel (%p257) target = $region40
        $region39: #{tpu_custom_call.1} parent=31 // pred_region
          %s260 = sand.u32 %s22, 1
          %s261 = scalar_lea.sflag [#allocation6], %s260
          %s262 = sand.u32 %s58, 1
          %s263 = smul.addr %s262, 64
          %s264 = scalar_lea.vmem [#allocation5], %s263
          %s265 = smul.u32 8, %s22
          %s267 = ssub.s32 1024, 1024
          %268 = vsyncadd %s261, %s267
          %s269 = smul.addr %s265, 2
          %s270 = sadd.s32 1, %s269
          %s271 = smul.addr %s270, 128
          %s272 = scalar_lea.hbm %s1, %s271
          %s273 = sshll.u32 %s264, 4
          %s274 = int_to_ptr.vmem [resolvable:$true] %s273
          %279 = dma.hbm_to_vmem [thread:$0]  %s272, 1024, %s274, %s261, 256, 128, 8
        $region40: #{tpu_custom_call.1} parent=31 // pred_fallthru
          _
      $region32: #{tpu_custom_call.1} parent=5 // pred_fallthru
        _
      %p280 = scmp.le.s32.totalorder 1, %s22
      %p281 = scmp.lt.s32.totalorder %s22, 3
      %p282 = pnand %p280, %p281
      %p283 = pneg %p282
      // Predicated region
      $region41: #{tpu_custom_call.1} parent=5 // pred_check
        _
      $region42: #{tpu_custom_call.1} parent=5 // pred_check_branch
        %285 = sbr.rel (%p282) target = $region44
      $region43: #{tpu_custom_call.1} parent=5 // pred_region
        %s286 = ssub.s32 %s22, 1
        %s287 = sand.u32 %s35, 1
        %s288 = scalar_lea.sflag [#allocation3], %s287
        %s289 = sand.u32 %s35, 1
        %s290 = smul.addr %s289, 64
        %s291 = scalar_lea.vmem [#allocation2], %s290
        // Predicated region
        $region45: #{tpu_custom_call.1} parent=43 // pred_check
          %p292 = pneg %p48
        $region46: #{tpu_custom_call.1} parent=43 // pred_check_branch
          %294 = sbr.rel (%p292) target = $region48
        $region47: #{tpu_custom_call.1} parent=43 // pred_region
          %295 = dma.done %s288, 1024
        $region48: #{tpu_custom_call.1} parent=43 // pred_fallthru
          _
        %s296 = sand.u32 %s27, 1
        %s297 = scalar_lea.sflag [#allocation6], %s296
        %s298 = sand.u32 %s61, 1
        %s299 = smul.addr %s298, 64
        %s300 = scalar_lea.vmem [#allocation5], %s299
        // Predicated region
        $region49: #{tpu_custom_call.1} parent=43 // pred_check
          %p301 = pneg %p74
        $region50: #{tpu_custom_call.1} parent=43 // pred_check_branch
          %303 = sbr.rel (%p301) target = $region52
        $region51: #{tpu_custom_call.1} parent=43 // pred_region
          %304 = dma.done %s297, 1024
        $region52: #{tpu_custom_call.1} parent=43 // pred_fallthru
          _
        // Predicated region
        $region53: #{tpu_custom_call.1} parent=43 // pred_check
          %p305 = pneg %p95
        $region54: #{tpu_custom_call.1} parent=43 // pred_check_branch
          %307 = sbr.rel (%p305) target = $region56
        $region55: #{tpu_custom_call.1} parent=43 // pred_region
          %308 = dma.done [#allocation6], 2048
        $region56: #{tpu_custom_call.1} parent=43 // pred_fallthru
          _
        // Predicated region
        $region57: #{tpu_custom_call.1} parent=43 // pred_check
          %p309 = pneg %p116
        $region58: #{tpu_custom_call.1} parent=43 // pred_check_branch
          %311 = sbr.rel (%p309) target = $region60
        $region59: #{tpu_custom_call.1} parent=43 // pred_region
          %312 = dma.done [#allocation9], 2048
        $region60: #{tpu_custom_call.1} parent=43 // pred_fallthru
          _
        %s313 = sand.u32 %s35, 1
        %s314 = scalar_lea.sflag [#allocation3], %s313
        %s315 = sand.u32 %s35, 1
        %s316 = smul.addr %s315, 64
        %s317 = scalar_lea.vmem [#allocation2], %s316
        %p318 = pneg %p48
        %p319 = pneg %p45
        %s320 = sand.u32 %s27, 1
        %s321 = scalar_lea.sflag [#allocation6], %s320
        %s322 = sand.u32 %s61, 1
        %s323 = smul.addr %s322, 64
        %s324 = scalar_lea.vmem [#allocation5], %s323
        %p325 = pneg %p74
        %p326 = pneg %p71
        %p327 = pneg %p95
        %p328 = pneg %p92
        %p329 = pneg %p116
        %p330 = pneg %p113
        %p331 = pneg %p137
        %p332 = pneg %p134
        %p333 = pneg %p158
        %p334 = pneg %p155
        %p335 = pneg %p184
        %p336 = pneg %p181
        %s337 = sand.u32 %s171, 1
        %s338 = scalar_lea.sflag [#allocation4], %s337
        %s339 = sand.u32 %s171, 1
        %s340 = smul.addr %s339, 64
        %s341 = scalar_lea.vmem [#allocation10], %s340
        %s342 = smul.u32 8, %s27
        %s343 = smul.u32 8, %s27
        %s344 = smul.u32 8, %s27
        %v345 = vld [vmem:[%s291] sm:$0xff]
        %v346 = vld [vmem:[%s291 + $0x8] sm:$0xff]
        %v347 = vld [vmem:[%s291 + $0x10] sm:$0xff]
        %v348 = vld [vmem:[%s291 + $0x18] sm:$0xff]
        %v349 = vld [vmem:[%s291 + $0x20] sm:$0xff]
        %v350 = vld [vmem:[%s291 + $0x28] sm:$0xff]
        %v351 = vld [vmem:[%s291 + $0x30] sm:$0xff]
        %v352 = vld [vmem:[%s291 + $0x38] sm:$0xff]
        %v353 = vld [vmem:[%s300] sm:$0xff]
        %v354 = vld [vmem:[%s300 + $0x8] sm:$0xff]
        %v355 = vld [vmem:[%s300 + $0x10] sm:$0xff]
        %v356 = vld [vmem:[%s300 + $0x18] sm:$0xff]
        %v357 = vld [vmem:[%s300 + $0x20] sm:$0xff]
        %v358 = vld [vmem:[%s300 + $0x28] sm:$0xff]
        %v359 = vld [vmem:[%s300 + $0x30] sm:$0xff]
        %v360 = vld [vmem:[%s300 + $0x38] sm:$0xff]
        %361 = vadd.xlane.f32.xlu0 %v345
        %v362 = vpop.xlane.xlu0 %361
        %363 = vadd.xlane.f32.xlu0 %v346
        %v364 = vpop.xlane.xlu0 %363
        %365 = vadd.xlane.f32.xlu0 %v347
        %v366 = vpop.xlane.xlu0 %365
        %367 = vadd.xlane.f32.xlu0 %v348
        %v368 = vpop.xlane.xlu0 %367
        %369 = vadd.xlane.f32.xlu0 %v349
        %v370 = vpop.xlane.xlu0 %369
        %371 = vadd.xlane.f32.xlu0 %v350
        %v372 = vpop.xlane.xlu0 %371
        %373 = vadd.xlane.f32.xlu0 %v351
        %v374 = vpop.xlane.xlu0 %373
        %375 = vadd.xlane.f32.xlu0 %v352
        %v376 = vpop.xlane.xlu0 %375
        %377 = vadd.xlane.f32.xlu0 %v353
        %v378 = vpop.xlane.xlu0 %377
        %379 = vadd.xlane.f32.xlu0 %v354
        %v380 = vpop.xlane.xlu0 %379
        %381 = vadd.xlane.f32.xlu0 %v355
        %v382 = vpop.xlane.xlu0 %381
        %383 = vadd.xlane.f32.xlu0 %v356
        %v384 = vpop.xlane.xlu0 %383
        %385 = vadd.xlane.f32.xlu0 %v357
        %v386 = vpop.xlane.xlu0 %385
        %387 = vadd.xlane.f32.xlu0 %v358
        %v388 = vpop.xlane.xlu0 %387
        %389 = vadd.xlane.f32.xlu0 %v359
        %v390 = vpop.xlane.xlu0 %389
        %391 = vadd.xlane.f32.xlu0 %v360
        %v392 = vpop.xlane.xlu0 %391
        %v393 = vadd.f32 %v362, %v378
        %v394 = vadd.f32 %v364, %v380
        %v395 = vadd.f32 %v366, %v382
        %v396 = vadd.f32 %v368, %v384
        %v397 = vadd.f32 %v370, %v386
        %v398 = vadd.f32 %v372, %v388
        %v399 = vadd.f32 %v374, %v390
        %v400 = vadd.f32 %v376, %v392
        %v401 = vmul.f32 %v345, %v345
        %v402 = vmul.f32 %v346, %v346
        %v403 = vmul.f32 %v347, %v347
        %v404 = vmul.f32 %v348, %v348
        %v405 = vmul.f32 %v349, %v349
        %v406 = vmul.f32 %v350, %v350
        %v407 = vmul.f32 %v351, %v351
        %v408 = vmul.f32 %v352, %v352
        %409 = vadd.xlane.f32.xlu0 %v401
        %v410 = vpop.xlane.xlu0 %409
        %411 = vadd.xlane.f32.xlu0 %v402
        %v412 = vpop.xlane.xlu0 %411
        %413 = vadd.xlane.f32.xlu0 %v403
        %v414 = vpop.xlane.xlu0 %413
        %415 = vadd.xlane.f32.xlu0 %v404
        %v416 = vpop.xlane.xlu0 %415
        %417 = vadd.xlane.f32.xlu0 %v405
        %v418 = vpop.xlane.xlu0 %417
        %419 = vadd.xlane.f32.xlu0 %v406
        %v420 = vpop.xlane.xlu0 %419
        %421 = vadd.xlane.f32.xlu0 %v407
        %v422 = vpop.xlane.xlu0 %421
        %423 = vadd.xlane.f32.xlu0 %v408
        %v424 = vpop.xlane.xlu0 %423
        %v425 = vmul.f32 %v353, %v353
        %v426 = vmul.f32 %v354, %v354
        %v427 = vmul.f32 %v355, %v355
        %v428 = vmul.f32 %v356, %v356
        %v429 = vmul.f32 %v357, %v357
        %v430 = vmul.f32 %v358, %v358
        %v431 = vmul.f32 %v359, %v359
        %v432 = vmul.f32 %v360, %v360
        %433 = vadd.xlane.f32.xlu0 %v425
        %v434 = vpop.xlane.xlu0 %433
        %435 = vadd.xlane.f32.xlu0 %v426
        %v436 = vpop.xlane.xlu0 %435
        %437 = vadd.xlane.f32.xlu0 %v427
        %v438 = vpop.xlane.xlu0 %437
        %439 = vadd.xlane.f32.xlu0 %v428
        %v440 = vpop.xlane.xlu0 %439
        %441 = vadd.xlane.f32.xlu0 %v429
        %v442 = vpop.xlane.xlu0 %441
        %443 = vadd.xlane.f32.xlu0 %v430
        %v444 = vpop.xlane.xlu0 %443
        %445 = vadd.xlane.f32.xlu0 %v431
        %v446 = vpop.xlane.xlu0 %445
        %447 = vadd.xlane.f32.xlu0 %v432
        %v448 = vpop.xlane.xlu0 %447
        %v449 = vadd.f32 %v410, %v434
        %v450 = vadd.f32 %v412, %v436
        %v451 = vadd.f32 %v414, %v438
        %v452 = vadd.f32 %v416, %v440
        %v453 = vadd.f32 %v418, %v442
        %v454 = vadd.f32 %v420, %v444
        %v455 = vadd.f32 %v422, %v446
        %v456 = vadd.f32 %v424, %v448
        %v457 = vmul.f32 %v393, 0.00390625
        %v458 = vmul.f32 %v394, 0.00390625
        %v459 = vmul.f32 %v395, 0.00390625
        %v460 = vmul.f32 %v396, 0.00390625
        %v461 = vmul.f32 %v397, 0.00390625
        %v462 = vmul.f32 %v398, 0.00390625
        %v463 = vmul.f32 %v399, 0.00390625
        %v464 = vmul.f32 %v400, 0.00390625
        %v465 = vmul.f32 %v449, 0.00390625
        %v466 = vmul.f32 %v450, 0.00390625
        %v467 = vmul.f32 %v451, 0.00390625
        %v468 = vmul.f32 %v452, 0.00390625
        %v469 = vmul.f32 %v453, 0.00390625
        %v470 = vmul.f32 %v454, 0.00390625
        %v471 = vmul.f32 %v455, 0.00390625
        %v472 = vmul.f32 %v456, 0.00390625
        %v473 = vmul.f32 %v457, %v457
        %v474 = vmul.f32 %v458, %v458
        %v475 = vmul.f32 %v459, %v459
        %v476 = vmul.f32 %v460, %v460
        %v477 = vmul.f32 %v461, %v461
        %v478 = vmul.f32 %v462, %v462
        %v479 = vmul.f32 %v463, %v463
        %v480 = vmul.f32 %v464, %v464
        %v481 = vsub.f32 %v465, %v473
        %v482 = vsub.f32 %v466, %v474
        %v483 = vsub.f32 %v467, %v475
        %v484 = vsub.f32 %v468, %v476
        %v485 = vsub.f32 %v469, %v477
        %v486 = vsub.f32 %v470, %v478
        %v487 = vsub.f32 %v471, %v479
        %v488 = vsub.f32 %v472, %v480
        %v489 = vadd.f32 %v481, 1e-05
        %v490 = vadd.f32 %v482, 1e-05
        %v491 = vadd.f32 %v483, 1e-05
        %v492 = vadd.f32 %v484, 1e-05
        %v493 = vadd.f32 %v485, 1e-05
        %v494 = vadd.f32 %v486, 1e-05
        %v495 = vadd.f32 %v487, 1e-05
        %v496 = vadd.f32 %v488, 1e-05
        %v497 = vrsqrt.pop %v489
        %v498 = vrsqrt.pop %v490
        %v499 = vrsqrt.pop %v491
        %v500 = vrsqrt.pop %v492
        %v501 = vrsqrt.pop %v493
        %v502 = vrsqrt.pop %v494
        %v503 = vrsqrt.pop %v495
        %v504 = vrsqrt.pop %v496
        %v505 = vld [vmem:[#allocation7] sm:$0xff]
        %v506 = vld [vmem:[#allocation7 + $0x8] sm:$0xff]
        %v507 = vld [vmem:[#allocation7 + $0x10] sm:$0xff]
        %v508 = vld [vmem:[#allocation7 + $0x18] sm:$0xff]
        %v509 = vld [vmem:[#allocation7 + $0x20] sm:$0xff]
        %v510 = vld [vmem:[#allocation7 + $0x28] sm:$0xff]
        %v511 = vld [vmem:[#allocation7 + $0x30] sm:$0xff]
        %v512 = vld [vmem:[#allocation7 + $0x38] sm:$0xff]
        %v513 = vld [vmem:[#allocation7 + $0x40] sm:$0xff]
        %v514 = vld [vmem:[#allocation7 + $0x48] sm:$0xff]
        %v515 = vld [vmem:[#allocation7 + $0x50] sm:$0xff]
        %v516 = vld [vmem:[#allocation7 + $0x58] sm:$0xff]
        %v517 = vld [vmem:[#allocation7 + $0x60] sm:$0xff]
        %v518 = vld [vmem:[#allocation7 + $0x68] sm:$0xff]
        %v519 = vld [vmem:[#allocation7 + $0x70] sm:$0xff]
        %v520 = vld [vmem:[#allocation7 + $0x78] sm:$0xff]
        %v521 = vld [vmem:[#allocation8] sm:$0xff]
        %v522 = vld [vmem:[#allocation8 + $0x8] sm:$0xff]
        %v523 = vld [vmem:[#allocation8 + $0x10] sm:$0xff]
        %v524 = vld [vmem:[#allocation8 + $0x18] sm:$0xff]
        %v525 = vld [vmem:[#allocation8 + $0x20] sm:$0xff]
        %v526 = vld [vmem:[#allocation8 + $0x28] sm:$0xff]
        %v527 = vld [vmem:[#allocation8 + $0x30] sm:$0xff]
        %v528 = vld [vmem:[#allocation8 + $0x38] sm:$0xff]
        %v529 = vld [vmem:[#allocation8 + $0x40] sm:$0xff]
        %v530 = vld [vmem:[#allocation8 + $0x48] sm:$0xff]
        %v531 = vld [vmem:[#allocation8 + $0x50] sm:$0xff]
        %v532 = vld [vmem:[#allocation8 + $0x58] sm:$0xff]
        %v533 = vld [vmem:[#allocation8 + $0x60] sm:$0xff]
        %v534 = vld [vmem:[#allocation8 + $0x68] sm:$0xff]
        %v535 = vld [vmem:[#allocation8 + $0x70] sm:$0xff]
        %v536 = vld [vmem:[#allocation8 + $0x78] sm:$0xff]
        %537 = vmatprep.subr.mxu0 0.0
        %538 = vmatpush1.msra.mxu0 %v521
        %539 = vmatprep.subr.mxu0 0.0
        %540 = vmatpush1.msra.mxu0 %v522
        %541 = vmatprep.subr.mxu0 0.0
        %542 = vmatpush1.msra.mxu0 %v523
        %543 = vmatprep.subr.mxu0 0.0
        %544 = vmatpush1.msra.mxu0 %v524
        %545 = vmatprep.subr.mxu0 0.0
        %546 = vmatpush1.msra.mxu0 %v525
        %547 = vmatprep.subr.mxu0 0.0
        %548 = vmatpush1.msra.mxu0 %v526
        %549 = vmatprep.subr.mxu0 0.0
        %550 = vmatpush1.msra.mxu0 %v527
        %551 = vmatprep.subr.mxu0 0.0
        %552 = vmatpush1.msra.mxu0 %v528
        %553 = vmatprep.subr.mxu0 0.0
        %554 = vmatpush1.msra.mxu0 %v529
        %555 = vmatprep.subr.mxu0 0.0
        %556 = vmatpush1.msra.mxu0 %v530
        %557 = vmatprep.subr.mxu0 0.0
        %558 = vmatpush1.msra.mxu0 %v531
        %559 = vmatprep.subr.mxu0 0.0
        %560 = vmatpush1.msra.mxu0 %v532
        %561 = vmatprep.subr.mxu0 0.0
        %562 = vmatpush1.msra.mxu0 %v533
        %563 = vmatprep.subr.mxu0 0.0
        %564 = vmatpush1.msra.mxu0 %v534
        %565 = vmatprep.subr.mxu0 0.0
        %566 = vmatpush1.msra.mxu0 %v535
        %567 = vmatprep.subr.mxu0 0.0
        %568 = vmatpush1.msra.mxu0 %v536
        %569 = vmatprep.subr.mxu0 0.0
        %570 = vmatpush1.msra.mxu0 0.0
        %571 = vmatprep.subr.mxu0 0.0
        %572 = vmatpush1.msra.mxu0 0.0
        %573 = vmatprep.subr.mxu0 0.0
        %574 = vmatpush1.msra.mxu0 0.0
        %575 = vmatprep.subr.mxu0 0.0
        %576 = vmatpush1.msra.mxu0 0.0
        %577 = vmatprep.subr.mxu0 0.0
        %578 = vmatpush1.msra.mxu0 0.0
        %579 = vmatprep.subr.mxu0 0.0
        %580 = vmatpush1.msra.mxu0 0.0
        %581 = vmatprep.subr.mxu0 0.0
        %582 = vmatpush1.msra.mxu0 0.0
        %583 = vmatprep.subr.mxu0 0.0
        %584 = vmatpush1.msra.mxu0 0.0
        %585 = vmatprep.subr.mxu0 0.0
        %586 = vmatpush1.msra.mxu0 0.0
        %587 = vmatprep.subr.mxu0 0.0
        %588 = vmatpush1.msra.mxu0 0.0
        %589 = vmatprep.subr.mxu0 0.0
        %590 = vmatpush1.msra.mxu0 0.0
        %591 = vmatprep.subr.mxu0 0.0
        %592 = vmatpush1.msra.mxu0 0.0
        %593 = vmatprep.subr.mxu0 0.0
        %594 = vmatpush1.msra.mxu0 0.0
        %595 = vmatprep.subr.mxu0 0.0
        %596 = vmatpush1.msra.mxu0 0.0
        %597 = vmatprep.subr.mxu0 0.0
        %598 = vmatpush1.msra.mxu0 0.0
        %599 = vmatprep.subr.mxu0 0.0
        %600 = vmatpush1.msra.mxu0 0.0
        %601 = vmatprep.mubr.f32.mxu0 0.0
        %602 = vmatmul.mubr.f32.gmra.mrb[0].mxu0 %v353
        %v603 = vpop.f32.mrb[0].mxu0
        %v604 = vadd.f32 0.0, %v603
        %v605 = vpop.f32.mrb[0].mxu0
        %606 = vmatprep.mubr.f32.mxu0 0.0
        %607 = vmatmul.mubr.f32.gmra.mrb[0].mxu0 %v354
        %v608 = vpop.f32.mrb[0].mxu0
        %v609 = vadd.f32 0.0, %v608
        %v610 = vpop.f32.mrb[0].mxu0
        %611 = vmatprep.mubr.f32.mxu0 0.0
        %612 = vmatmul.mubr.f32.gmra.mrb[0].mxu0 %v355
        %v613 = vpop.f32.mrb[0].mxu0
        %v614 = vadd.f32 0.0, %v613
        %v615 = vpop.f32.mrb[0].mxu0
        %616 = vmatprep.mubr.f32.mxu0 0.0
        %617 = vmatmul.mubr.f32.gmra.mrb[0].mxu0 %v356
        %v618 = vpop.f32.mrb[0].mxu0
        %v619 = vadd.f32 0.0, %v618
        %v620 = vpop.f32.mrb[0].mxu0
        %621 = vmatprep.mubr.f32.mxu0 0.0
        %622 = vmatmul.mubr.f32.gmra.mrb[0].mxu0 %v357
        %v623 = vpop.f32.mrb[0].mxu0
        %v624 = vadd.f32 0.0, %v623
        %v625 = vpop.f32.mrb[0].mxu0
        %626 = vmatprep.mubr.f32.mxu0 0.0
        %627 = vmatmul.mubr.f32.gmra.mrb[0].mxu0 %v358
        %v628 = vpop.f32.mrb[0].mxu0
        %v629 = vadd.f32 0.0, %v628
        %v630 = vpop.f32.mrb[0].mxu0
        %631 = vmatprep.mubr.f32.mxu0 0.0
        %632 = vmatmul.mubr.f32.gmra.mrb[0].mxu0 %v359
        %v633 = vpop.f32.mrb[0].mxu0
        %v634 = vadd.f32 0.0, %v633
        %v635 = vpop.f32.mrb[0].mxu0
        %636 = vmatprep.mubr.f32.mxu0 0.0
        %637 = vmatmul.mubr.f32.gmra.mrb[0].mxu0 %v360
        %v638 = vpop.f32.mrb[0].mxu0
        %v639 = vadd.f32 0.0, %v638
        %v640 = vpop.f32.mrb[0].mxu0
        %641 = vdwg.mxu0
        %642 = vmatprep.subr.mxu0 0.0
        %643 = vmatpush1.msra.mxu0 %v505
        %644 = vmatprep.subr.mxu0 0.0
        %645 = vmatpush1.msra.mxu0 %v506
        %646 = vmatprep.subr.mxu0 0.0
        %647 = vmatpush1.msra.mxu0 %v507
        %648 = vmatprep.subr.mxu0 0.0
        %649 = vmatpush1.msra.mxu0 %v508
        %650 = vmatprep.subr.mxu0 0.0
        %651 = vmatpush1.msra.mxu0 %v509
        %652 = vmatprep.subr.mxu0 0.0
        %653 = vmatpush1.msra.mxu0 %v510
        %654 = vmatprep.subr.mxu0 0.0
        %655 = vmatpush1.msra.mxu0 %v511
        %656 = vmatprep.subr.mxu0 0.0
        %657 = vmatpush1.msra.mxu0 %v512
        %658 = vmatprep.subr.mxu0 0.0
        %659 = vmatpush1.msra.mxu0 %v513
        %660 = vmatprep.subr.mxu0 0.0
        %661 = vmatpush1.msra.mxu0 %v514
        %662 = vmatprep.subr.mxu0 0.0
        %663 = vmatpush1.msra.mxu0 %v515
        %664 = vmatprep.subr.mxu0 0.0
        %665 = vmatpush1.msra.mxu0 %v516
        %666 = vmatprep.subr.mxu0 0.0
        %667 = vmatpush1.msra.mxu0 %v517
        %668 = vmatprep.subr.mxu0 0.0
        %669 = vmatpush1.msra.mxu0 %v518
        %670 = vmatprep.subr.mxu0 0.0
        %671 = vmatpush1.msra.mxu0 %v519
        %672 = vmatprep.subr.mxu0 0.0
        %673 = vmatpush1.msra.mxu0 %v520
        %674 = vmatprep.subr.mxu0 0.0
        %675 = vmatpush1.msra.mxu0 0.0
        %676 = vmatprep.subr.mxu0 0.0
        %677 = vmatpush1.msra.mxu0 0.0
        %678 = vmatprep.subr.mxu0 0.0
        %679 = vmatpush1.msra.mxu0 0.0
        %680 = vmatprep.subr.mxu0 0.0
        %681 = vmatpush1.msra.mxu0 0.0
        %682 = vmatprep.subr.mxu0 0.0
        %683 = vmatpush1.msra.mxu0 0.0
        %684 = vmatprep.subr.mxu0 0.0
        %685 = vmatpush1.msra.mxu0 0.0
        %686 = vmatprep.subr.mxu0 0.0
        %687 = vmatpush1.msra.mxu0 0.0
        %688 = vmatprep.subr.mxu0 0.0
        %689 = vmatpush1.msra.mxu0 0.0
        %690 = vmatprep.subr.mxu0 0.0
        %691 = vmatpush1.msra.mxu0 0.0
        %692 = vmatprep.subr.mxu0 0.0
        %693 = vmatpush1.msra.mxu0 0.0
        %694 = vmatprep.subr.mxu0 0.0
        %695 = vmatpush1.msra.mxu0 0.0
        %696 = vmatprep.subr.mxu0 0.0
        %697 = vmatpush1.msra.mxu0 0.0
        %698 = vmatprep.subr.mxu0 0.0
        %699 = vmatpush1.msra.mxu0 0.0
        %700 = vmatprep.subr.mxu0 0.0
        %701 = vmatpush1.msra.mxu0 0.0
        %702 = vmatprep.subr.mxu0 0.0
        %703 = vmatpush1.msra.mxu0 0.0
        %704 = vmatprep.subr.mxu0 0.0
        %705 = vmatpush1.msra.mxu0 0.0
        %706 = vmatprep.mubr.f32.mxu0 0.0
        %707 = vmatmul.mubr.f32.gmra.mrb[0].mxu0 %v345
        %v708 = vpop.f32.mrb[0].mxu0
        %v709 = vadd.f32 %v604, %v708
        %v710 = vpop.f32.mrb[0].mxu0
        %711 = vmatprep.mubr.f32.mxu0 0.0
        %712 = vmatmul.mubr.f32.gmra.mrb[0].mxu0 %v346
        %v713 = vpop.f32.mrb[0].mxu0
        %v714 = vadd.f32 %v609, %v713
        %v715 = vpop.f32.mrb[0].mxu0
        %716 = vmatprep.mubr.f32.mxu0 0.0
        %717 = vmatmul.mubr.f32.gmra.mrb[0].mxu0 %v347
        %v718 = vpop.f32.mrb[0].mxu0
        %v719 = vadd.f32 %v614, %v718
        %v720 = vpop.f32.mrb[0].mxu0
        %721 = vmatprep.mubr.f32.mxu0 0.0
        %722 = vmatmul.mubr.f32.gmra.mrb[0].mxu0 %v348
        %v723 = vpop.f32.mrb[0].mxu0
        %v724 = vadd.f32 %v619, %v723
        %v725 = vpop.f32.mrb[0].mxu0
        %726 = vmatprep.mubr.f32.mxu0 0.0
        %727 = vmatmul.mubr.f32.gmra.mrb[0].mxu0 %v349
        %v728 = vpop.f32.mrb[0].mxu0
        %v729 = vadd.f32 %v624, %v728
        %v730 = vpop.f32.mrb[0].mxu0
        %731 = vmatprep.mubr.f32.mxu0 0.0
        %732 = vmatmul.mubr.f32.gmra.mrb[0].mxu0 %v350
        %v733 = vpop.f32.mrb[0].mxu0
        %v734 = vadd.f32 %v629, %v733
        %v735 = vpop.f32.mrb[0].mxu0
        %736 = vmatprep.mubr.f32.mxu0 0.0
        %737 = vmatmul.mubr.f32.gmra.mrb[0].mxu0 %v351
        %v738 = vpop.f32.mrb[0].mxu0
        %v739 = vadd.f32 %v634, %v738
        %v740 = vpop.f32.mrb[0].mxu0
        %741 = vmatprep.mubr.f32.mxu0 0.0
        %742 = vmatmul.mubr.f32.gmra.mrb[0].mxu0 %v352
        %v743 = vpop.f32.mrb[0].mxu0
        %v744 = vadd.f32 %v639, %v743
        %v745 = vpop.f32.mrb[0].mxu0
        %746 = vdwg.mxu0
        %v747 = vld [vmem:[%s4] sm:$0x1]
        %v749 = vlaneseq
        %v750 = vshrl.u32 %v749, 7
        %v751 = vsub.s32 0, %v750
        %v752 = vrot.slane %v747, %v751
        %v754 = vmul.f32 %v457, %v752
        %v755 = vmul.f32 %v458, %v752
        %v756 = vmul.f32 %v459, %v752
        %v757 = vmul.f32 %v460, %v752
        %v758 = vmul.f32 %v461, %v752
        %v759 = vmul.f32 %v462, %v752
        %v760 = vmul.f32 %v463, %v752
        %v761 = vmul.f32 %v464, %v752
        %v762 = vsub.f32 %v709, %v754
        %v763 = vsub.f32 %v714, %v755
        %v764 = vsub.f32 %v719, %v756
        %v765 = vsub.f32 %v724, %v757
        %v766 = vsub.f32 %v729, %v758
        %v767 = vsub.f32 %v734, %v759
        %v768 = vsub.f32 %v739, %v760
        %v769 = vsub.f32 %v744, %v761
        %v770 = vmul.f32 %v497, %v762
        %v771 = vmul.f32 %v498, %v763
        %v772 = vmul.f32 %v499, %v764
        %v773 = vmul.f32 %v500, %v765
        %v774 = vmul.f32 %v501, %v766
        %v775 = vmul.f32 %v502, %v767
        %v776 = vmul.f32 %v503, %v768
        %v777 = vmul.f32 %v504, %v769
        %v778 = vld [vmem:[%s5] sm:$0x1]
        %v780 = vlaneseq
        %v781 = vshrl.u32 %v780, 7
        %v782 = vsub.s32 0, %v781
        %v783 = vrot.slane %v778, %v782
        %v785 = vadd.f32 %v770, %v783
        %v786 = vadd.f32 %v771, %v783
        %v787 = vadd.f32 %v772, %v783
        %v788 = vadd.f32 %v773, %v783
        %v789 = vadd.f32 %v774, %v783
        %v790 = vadd.f32 %v775, %v783
        %v791 = vadd.f32 %v776, %v783
        %v792 = vadd.f32 %v777, %v783
        %793 = vst [vmem:[%s341] sm:$0xff] %v785
        %794 = vst [vmem:[%s341 + $0x8] sm:$0xff] %v786
        %795 = vst [vmem:[%s341 + $0x10] sm:$0xff] %v787
        %796 = vst [vmem:[%s341 + $0x18] sm:$0xff] %v788
        %797 = vst [vmem:[%s341 + $0x20] sm:$0xff] %v789
        %798 = vst [vmem:[%s341 + $0x28] sm:$0xff] %v790
        %799 = vst [vmem:[%s341 + $0x30] sm:$0xff] %v791
        %800 = vst [vmem:[%s341 + $0x38] sm:$0xff] %v792
        %s801 = sand.u32 %s171, 1
        %s802 = scalar_lea.sflag [#allocation4], %s801
        %s803 = sand.u32 %s171, 1
        %s804 = smul.addr %s803, 64
        %s805 = scalar_lea.vmem [#allocation10], %s804
        // Predicated region
        $region61: #{tpu_custom_call.1} parent=43 // pred_check
          %p806 = pneg %p181
        $region62: #{tpu_custom_call.1} parent=43 // pred_check_branch
          %808 = sbr.rel (%p806) target = $region64
        $region63: #{tpu_custom_call.1} parent=43 // pred_region
          %s809 = smul.u32 8, %s27
          %s811 = ssub.s32 1024, 1024
          %812 = vsyncadd %s802, %s811
          %s813 = smul.addr %s809, 128
          %s814 = scalar_lea.hbm %s6, %s813
          %s815 = sshll.u32 %s805, 4
          %s816 = int_to_ptr.vmem [resolvable:$true] %s815
          %821 = dma.vmem_to_hbm [thread:$0]  %s816, 1024, %s814, %s802, 128, 128, 8
        $region64: #{tpu_custom_call.1} parent=43 // pred_fallthru
          _
      $region44: #{tpu_custom_call.1} parent=5 // pred_fallthru
        _
      %p822 = scmp.le.s32.totalorder 2, %s22
      // Predicated region
      $region65: #{tpu_custom_call.1} parent=5 // pred_check
        %p823 = pneg %p822
      $region66: #{tpu_custom_call.1} parent=5 // pred_check_branch
        %825 = sbr.rel (%p823) target = $region68
      $region67: #{tpu_custom_call.1} parent=5 // pred_region
        %s826 = ssub.s32 %s22, 2
        // Predicated region
        $region69: #{tpu_custom_call.1} parent=67 // pred_check
          %p827 = pneg %p187
        $region70: #{tpu_custom_call.1} parent=67 // pred_check_branch
          %829 = sbr.rel (%p827) target = $region72
        $region71: #{tpu_custom_call.1} parent=67 // pred_region
          %s830 = sand.u32 %s172, 1
          %s831 = scalar_lea.sflag [#allocation4], %s830
          %s832 = sand.u32 %s172, 1
          %s833 = smul.addr %s832, 64
          %s834 = scalar_lea.vmem [#allocation10], %s833
          %835 = dma.done %s831, 1024
        $region72: #{tpu_custom_call.1} parent=67 // pred_fallthru
          _
      $region68: #{tpu_custom_call.1} parent=5 // pred_fallthru
        _
    $region6: #{tpu_custom_call.1} parent=1 // loop_footer
      %s26 = sadd.s32 1, %s22
    $region7: #{tpu_custom_call.1} parent=1 // loop_footer_branch
      %21 = sbr.rel target = $region3
    $region8: #{tpu_custom_call.1} parent=1 // loop_exit
      _
    %836 = vsyncpa [#allocation3], 1
    %s837 = scalar_lea.sflag [#allocation3], 1
    %838 = vsyncpa %s837, 1
    %839 = vsyncpa [#allocation6], 1
    %s840 = scalar_lea.sflag [#allocation6], 1
    %841 = vsyncpa %s840, 1
    %842 = vsyncpa [#allocation9], 1
    %843 = vsyncpa [#allocation4], 1
    %s844 = scalar_lea.sflag [#allocation4], 1
    %845 = vsyncpa %s844, 1

</llo_original>
